<compile_context>
chip_gen: v6e
topology: v6e:2x2x1
jax: 0.10.0
libtpu: 0.0.40
codegen_flags: <defaults>
</compile_context>

<pallas_src>
import functools
import math

import jax
import jax.numpy as jnp
from jax.experimental import pallas as pl
from jax.experimental.pallas import tpu as pltpu


def _round_up(n, m):
    return ((n + m - 1) // m) * m


# ------------------------------ fused kernel --------------------------------
def _mlp_kernel(x_ref, w1_ref, c1_ref, w2_ref, c2_ref, w3_ref, b3_ref, o_ref):
    # x_ref : (TB, 3)  f32   batch tile (batch on sublanes, features on lanes)
    # w1_ref: (3, 16)  f32   linin W^T with bnin scale folded in (used on VPU)
    # c1_ref: (1, 16)  f32   folded bias/shift for layer 1
    # w2_ref: (16, 32) bf16  linbout W^T with bnbout scale folded in (MXU)
    # c2_ref: (1, 32)  f32   folded bias/shift for layer 2
    # w3_ref: (32, 6)  bf16  linout W^T (MXU)
    # b3_ref: (1, 6)   f32   linout bias
    # o_ref : (TB, 6)  f32   softmax output tile
    x = x_ref[...]
    w1 = w1_ref[...]

    # Layer 1 (K=3) on the VPU: a K=3 matmul would still occupy a full
    # 128/256-deep MXU pass, so three broadcast multiply-adds are cheaper and
    # leave the MXU push slot free.  Dropout is identity in eval mode.
    h1 = (x[:, 0:1] * w1[0:1, :]
          + x[:, 1:2] * w1[1:2, :]
          + x[:, 2:3] * w1[2:3, :]) + c1_ref[...]
    h1 = jnp.maximum(h1, 0.0)

    # Layer 2: linbout -> bnbout (folded) -> relu.  bf16 MXU operands, f32 acc.
    h2 = jnp.dot(h1.astype(jnp.bfloat16), w2_ref[...],
                 preferred_element_type=jnp.float32) + c2_ref[...]
    h2 = jnp.maximum(h2, 0.0)

    # Layer 3: linout -> softmax(dim=1).
    logits = jnp.dot(h2.astype(jnp.bfloat16), w3_ref[...],
                     preferred_element_type=jnp.float32) + b3_ref[...]
    m = jnp.max(logits, axis=-1, keepdims=True)
    e = jnp.exp(logits - m)
    denom = jnp.sum(e, axis=-1, keepdims=True)
    o_ref[...] = (e * pl.reciprocal(denom, approx=True)).astype(o_ref.dtype)


# ------------------------------ param folding --------------------------------
def fold_params(params, eps=1e-5):
    """Fold eval-mode BatchNorm into the preceding Linear.  Call ONCE outside
    the per-step hot path.
        bn(y) = (y - mean) * g / sqrt(var + eps) + beta,   y = x @ W^T + b
              = x @ (W^T * s) + ((b - mean) * s + beta),   s = g / sqrt(var + eps)
    MXU-bound weights (layers 2/3) are stored in bf16; VPU layer-1 weights and
    all biases stay f32.
    """
    s1 = params["bn1_g"] / jnp.sqrt(params["bn1_v"] + eps)
    s2 = params["bn2_g"] / jnp.sqrt(params["bn2_v"] + eps)
    return {
        "w1": (params["w1"].T * s1[None, :]).astype(jnp.float32),            # (3, 16)
        "c1": ((params["b1"] - params["bn1_m"]) * s1
               + params["bn1_b"]).reshape(1, -1).astype(jnp.float32),        # (1, 16)
        "w2": (params["w2"].T * s2[None, :]).astype(jnp.bfloat16),           # (16, 32)
        "c2": ((params["b2"] - params["bn2_m"]) * s2
               + params["bn2_b"]).reshape(1, -1).astype(jnp.float32),        # (1, 32)
        "w3": params["w3"].T.astype(jnp.bfloat16),                           # (32, 6)
        "b3": params["b3"].reshape(1, -1).astype(jnp.float32),               # (1, 6)
    }


# -------------------------------- wrapper ------------------------------------
@functools.partial(jax.jit, static_argnames=("block_b",))
def mlp_net_v1_forward(x, folded, block_b=1024):
    """x: (B, ...) with trailing dims flattening to 3 features (torch.flatten(x, 1))."""
    B = x.shape[0]
    xf = x.reshape(B, -1).astype(jnp.float32)       # torch.flatten(input_data, 1)
    in_f = xf.shape[1]
    out_f = folded["w3"].shape[-1]

    # Batch tile: multiple of 8 sublanes; pad B to a multiple of the tile so the
    # tail block never contains garbage stores (padded rows are zeros -> finite
    # softmax) and slice them off afterwards.
    tb = min(block_b, _round_up(B, 8))
    bp = _round_up(B, tb)
    if bp != B:
        xf = jnp.pad(xf, ((0, bp - B), (0, 0)))

    def const_spec(shape):
        return pl.BlockSpec(shape, lambda i: (0,) * len(shape))  # resident weights

    cost = pl.CostEstimate(
        flops=2 * bp * (3 * 16 + 16 * 32 + 32 * 6),
        transcendentals=7 * bp,  # 6 exp + 1 reciprocal per row
        bytes_accessed=(xf.size * 4 + bp * out_f * 4
                        + sum(int(v.size) * v.dtype.itemsize for v in folded.values())),
    )

    out = pl.pallas_call(
        _mlp_kernel,
        out_shape=jax.ShapeDtypeStruct((bp, out_f), jnp.float32),
        grid=(bp // tb,),
        in_specs=[
            pl.BlockSpec((tb, in_f), lambda i: (i, 0)),   # x: streamed per batch tile
            const_spec(folded["w1"].shape),
            const_spec(folded["c1"].shape),
            const_spec(folded["w2"].shape),
            const_spec(folded["c2"].shape),
            const_spec(folded["w3"].shape),
            const_spec(folded["b3"].shape),
        ],
        out_specs=pl.BlockSpec((tb, out_f), lambda i: (i, 0)),
        compiler_params=pltpu.CompilerParams(dimension_semantics=("parallel",)),
        cost_estimate=cost,
    )(xf, folded["w1"], folded["c1"], folded["w2"], folded["c2"],
      folded["w3"], folded["b3"])
    return out[:B]


# ------------------------- params & pure-JAX reference ------------------------
def init_params(key):
    """Mimic PyTorch defaults: Linear U(-1/sqrt(fan_in), +), BN affine + running stats."""
    keys = jax.random.split(key, 14)
    p = {}

    def lin(kw, kb, out_f, in_f):
        bound = 1.0 / math.sqrt(in_f)
        w = jax.random.uniform(kw, (out_f, in_f), jnp.float32, -bound, bound)
        b = jax.random.uniform(kb, (out_f,), jnp.float32, -bound, bound)
        return w, b

    p["w1"], p["b1"] = lin(keys[0], keys[1], 16, 3)
    p["w2"], p["b2"] = lin(keys[2], keys[3], 32, 16)
    p["w3"], p["b3"] = lin(keys[4], keys[5], 6, 32)

    p["bn1_g"] = 1.0 + 0.1 * jax.random.normal(keys[6], (16,), jnp.float32)
    p["bn1_b"] = 0.1 * jax.random.normal(keys[7], (16,), jnp.float32)
    p["bn1_m"] = 0.1 * jax.random.normal(keys[8], (16,), jnp.float32)
    p["bn1_v"] = jax.random.uniform(keys[9], (16,), jnp.float32, 0.5, 1.5)

    p["bn2_g"] = 1.0 + 0.1 * jax.random.normal(keys[10], (32,), jnp.float32)
    p["bn2_b"] = 0.1 * jax.random.normal(keys[11], (32,), jnp.float32)
    p["bn2_m"] = 0.1 * jax.random.normal(keys[12], (32,), jnp.float32)
    p["bn2_v"] = jax.random.uniform(keys[13], (32,), jnp.float32, 0.5, 1.5)
    return p


def mlp_net_v1_reference(x, params, eps=1e-5):
    """Un-fused pure-JAX (f32) mirror of the PyTorch eval-mode forward."""
    B = x.shape[0]
    h = x.reshape(B, -1).astype(jnp.float32)
    h = h @ params["w1"].T + params["b1"]
    h = (h - params["bn1_m"]) / jnp.sqrt(params["bn1_v"] + eps) * params["bn1_g"] + params["bn1_b"]
    h = jnp.maximum(h, 0.0)
    # TODO(synk): training-mode Dropout(0.5) / batch-stat BatchNorm not emitted; eval-mode forward only.
    h = h @ params["w2"].T + params["b2"]
    h = (h - params["bn2_m"]) / jnp.sqrt(params["bn2_v"] + eps) * params["bn2_g"] + params["bn2_b"]
    h = jnp.maximum(h, 0.0)
    h = h @ params["w3"].T + params["b3"]
    return jax.nn.softmax(h, axis=1)


if __name__ == "__main__":
    key = jax.random.PRNGKey(0)
    pkey, xkey, xkey2 = jax.random.split(key, 3)
    params = init_params(pkey)
    folded = fold_params(params)      # one-time BN fold, outside the hot path

    # Small shapes consistent with the module: flatten(input, 1) must yield 3
    # features for nn.Linear(3, 16).  batch=2, input (2, 1, 3).
    B = 2
    x = jax.random.normal(xkey, (B, 1, 3), jnp.float32)
    out = jax.block_until_ready(mlp_net_v1_forward(x, folded, block_b=1024))
    ref = mlp_net_v1_reference(x, params)
    assert out.shape == (B, 6), out.shape
    # bf16 MXU operands + approx reciprocal -> loosen tolerance vs. pure-f32 ref.
    assert jnp.allclose(out, ref, atol=2e-2, rtol=2e-2), "mismatch vs reference (B=2)"
    assert jnp.allclose(jnp.sum(out, axis=1), jnp.ones((B,)), atol=1e-2), "softmax rows must sum to 1"

    # Exercise the batch grid + ragged-tail padding path (3 grid steps).
    B2 = 2048 + 37
    x2 = jax.random.normal(xkey2, (B2, 3), jnp.float32)
    out2 = jax.block_until_ready(mlp_net_v1_forward(x2, folded, block_b=1024))
    ref2 = mlp_net_v1_reference(x2, params)
    assert out2.shape == (B2, 6), out2.shape
    assert jnp.allclose(out2, ref2, atol=2e-2, rtol=2e-2), "mismatch vs reference (tiled)"

    print("KERNEL_OK")
</pallas_src>

<mosaic_0001>
module attributes {stable_mosaic.version = 11 : i64} {
  func.func @_mlp_kernel(%arg0: i32, %arg1: memref<8x3xf32, #tpu.memory_space<vmem>>, %arg2: memref<3x16xf32, #tpu.memory_space<vmem>>, %arg3: memref<1x16xf32, #tpu.memory_space<vmem>>, %arg4: memref<16x32xbf16, #tpu.memory_space<vmem>>, %arg5: memref<1x32xf32, #tpu.memory_space<vmem>>, %arg6: memref<32x6xbf16, #tpu.memory_space<vmem>>, %arg7: memref<1x6xf32, #tpu.memory_space<vmem>>, %arg8: memref<8x6xf32, #tpu.memory_space<vmem>>) attributes {dimension_semantics = [#tpu.dimension_semantics<parallel>], iteration_bounds = array<i64: 1>, scalar_prefetch = 0 : i64, scratch_operands = 0 : i64, tpu.core_type = #tpu.core_type<tc>, window_params = [{transform_indices = @transform_0, window_bounds = array<i64: 8, 3>}, {pipeline_mode = #tpu.pipeline_mode<synchronous>, transform_indices = @transform_1, window_bounds = array<i64: 3, 16>}, {pipeline_mode = #tpu.pipeline_mode<synchronous>, transform_indices = @transform_2, window_bounds = array<i64: 1, 16>}, {pipeline_mode = #tpu.pipeline_mode<synchronous>, transform_indices = @transform_3, window_bounds = array<i64: 16, 32>}, {pipeline_mode = #tpu.pipeline_mode<synchronous>, transform_indices = @transform_4, window_bounds = array<i64: 1, 32>}, {pipeline_mode = #tpu.pipeline_mode<synchronous>, transform_indices = @transform_5, window_bounds = array<i64: 32, 6>}, {pipeline_mode = #tpu.pipeline_mode<synchronous>, transform_indices = @transform_6, window_bounds = array<i64: 1, 6>}, {transform_indices = @transform_7, window_bounds = array<i64: 8, 6>}]} {
    %c0 = arith.constant 0 : index
    %c0_0 = arith.constant 0 : index
    %0 = vector.load %arg1[%c0, %c0_0] : memref<8x3xf32, #tpu.memory_space<vmem>>, vector<8x3xf32>
    %c0_1 = arith.constant 0 : index
    %c0_2 = arith.constant 0 : index
    %1 = vector.load %arg2[%c0_1, %c0_2] : memref<3x16xf32, #tpu.memory_space<vmem>>, vector<3x16xf32>
    %2 = vector.extract_strided_slice %0 {offsets = [0, 0], sizes = [8, 1], strides = [1, 1]} : vector<8x3xf32> to vector<8x1xf32>
    %3 = vector.extract_strided_slice %1 {offsets = [0, 0], sizes = [1, 16], strides = [1, 1]} : vector<3x16xf32> to vector<1x16xf32>
    %4 = vector.broadcast %2 : vector<8x1xf32> to vector<8x16xf32>
    %5 = vector.broadcast %3 : vector<1x16xf32> to vector<8x16xf32>
    %6 = arith.mulf %4, %5 : vector<8x16xf32>
    %7 = vector.extract_strided_slice %0 {offsets = [0, 1], sizes = [8, 1], strides = [1, 1]} : vector<8x3xf32> to vector<8x1xf32>
    %8 = vector.extract_strided_slice %1 {offsets = [1, 0], sizes = [1, 16], strides = [1, 1]} : vector<3x16xf32> to vector<1x16xf32>
    %9 = vector.broadcast %7 : vector<8x1xf32> to vector<8x16xf32>
    %10 = vector.broadcast %8 : vector<1x16xf32> to vector<8x16xf32>
    %11 = arith.mulf %9, %10 : vector<8x16xf32>
    %12 = arith.addf %6, %11 : vector<8x16xf32>
    %13 = vector.extract_strided_slice %0 {offsets = [0, 2], sizes = [8, 1], strides = [1, 1]} : vector<8x3xf32> to vector<8x1xf32>
    %14 = vector.extract_strided_slice %1 {offsets = [2, 0], sizes = [1, 16], strides = [1, 1]} : vector<3x16xf32> to vector<1x16xf32>
    %15 = vector.broadcast %13 : vector<8x1xf32> to vector<8x16xf32>
    %16 = vector.broadcast %14 : vector<1x16xf32> to vector<8x16xf32>
    %17 = arith.mulf %15, %16 : vector<8x16xf32>
    %18 = arith.addf %12, %17 : vector<8x16xf32>
    %c0_3 = arith.constant 0 : index
    %c0_4 = arith.constant 0 : index
    %19 = vector.load %arg3[%c0_3, %c0_4] : memref<1x16xf32, #tpu.memory_space<vmem>>, vector<1x16xf32>
    %20 = vector.broadcast %19 : vector<1x16xf32> to vector<8x16xf32>
    %21 = arith.addf %18, %20 : vector<8x16xf32>
    %cst = arith.constant 0.000000e+00 : f32
    %22 = vector.broadcast %cst : f32 to vector<8x16xf32>
    %23 = arith.maximumf %21, %22 : vector<8x16xf32>
    %24 = arith.truncf %23 : vector<8x16xf32> to vector<8x16xbf16>
    %c0_5 = arith.constant 0 : index
    %c0_6 = arith.constant 0 : index
    %25 = vector.load %arg4[%c0_5, %c0_6] : memref<16x32xbf16, #tpu.memory_space<vmem>>, vector<16x32xbf16>
    %cst_7 = arith.constant dense<0.000000e+00> : vector<8x32xf32>
    %26 = tpu.matmul %24, %25, %cst_7 {dimension_numbers = #tpu.dot_dimension_numbers<[1], [0], [0], [1], [0, 0, 1, 1], [], []>} : vector<8x16xbf16>, vector<16x32xbf16>, vector<8x32xf32> -> vector<8x32xf32>
    %c0_8 = arith.constant 0 : index
    %c0_9 = arith.constant 0 : index
    %27 = vector.load %arg5[%c0_8, %c0_9] : memref<1x32xf32, #tpu.memory_space<vmem>>, vector<1x32xf32>
    %28 = vector.broadcast %27 : vector<1x32xf32> to vector<8x32xf32>
    %29 = arith.addf %26, %28 : vector<8x32xf32>
    %cst_10 = arith.constant 0.000000e+00 : f32
    %30 = vector.broadcast %cst_10 : f32 to vector<8x32xf32>
    %31 = arith.maximumf %29, %30 : vector<8x32xf32>
    %32 = arith.truncf %31 : vector<8x32xf32> to vector<8x32xbf16>
    %c0_11 = arith.constant 0 : index
    %c0_12 = arith.constant 0 : index
    %33 = vector.load %arg6[%c0_11, %c0_12] : memref<32x6xbf16, #tpu.memory_space<vmem>>, vector<32x6xbf16>
    %cst_13 = arith.constant dense<0.000000e+00> : vector<8x6xf32>
    %34 = tpu.matmul %32, %33, %cst_13 {dimension_numbers = #tpu.dot_dimension_numbers<[1], [0], [0], [1], [0, 0, 1, 1], [], []>} : vector<8x32xbf16>, vector<32x6xbf16>, vector<8x6xf32> -> vector<8x6xf32>
    %c0_14 = arith.constant 0 : index
    %c0_15 = arith.constant 0 : index
    %35 = vector.load %arg7[%c0_14, %c0_15] : memref<1x6xf32, #tpu.memory_space<vmem>>, vector<1x6xf32>
    %36 = vector.broadcast %35 : vector<1x6xf32> to vector<8x6xf32>
    %37 = arith.addf %34, %36 : vector<8x6xf32>
    %cst_16 = arith.constant dense<0xFF800000> : vector<8xf32>
    %38 = vector.multi_reduction <maximumf>, %37, %cst_16 [1] : vector<8x6xf32> to vector<8xf32>
    %39 = vector.shape_cast %38 : vector<8xf32> to vector<8x1xf32>
    %40 = vector.broadcast %39 : vector<8x1xf32> to vector<8x6xf32>
    %41 = arith.subf %37, %40 : vector<8x6xf32>
    %42 = math.exp %41 : vector<8x6xf32>
    %cst_17 = arith.constant dense<0.000000e+00> : vector<8xf32>
    %43 = vector.multi_reduction <add>, %42, %cst_17 [1] : vector<8x6xf32> to vector<8xf32>
    %44 = vector.shape_cast %43 : vector<8xf32> to vector<8x1xf32>
    %45 = tpu.reciprocal %44 {approx = true} : vector<8x1xf32> -> vector<8x1xf32>
    %46 = vector.broadcast %45 : vector<8x1xf32> to vector<8x6xf32>
    %47 = arith.mulf %42, %46 : vector<8x6xf32>
    %c0_18 = arith.constant 0 : index
    %c0_19 = arith.constant 0 : index
    %48 = vector.load %arg8[%c0_18, %c0_19] : memref<8x6xf32, #tpu.memory_space<vmem>>, vector<8x6xf32>
    tpu.vector_store %arg8[%c0_18, %c0_19], %47 {strides = array<i32>} : memref<8x6xf32, #tpu.memory_space<vmem>>, vector<8x6xf32>,
    return
  }
  func.func @transform_0(%arg0: i32) -> (i32, i32) {
    %c0_i32 = arith.constant 0 : i32
    %c0_i32_0 = arith.constant 0 : i32
    return %arg0, %c0_i32 : i32, i32
  }
  func.func @transform_1(%arg0: i32) -> (i32, i32) {
    %c0_i32 = arith.constant 0 : i32
    %c0_i32_0 = arith.constant 0 : i32
    %c0_i32_1 = arith.constant 0 : i32
    return %c0_i32, %c0_i32_0 : i32, i32
  }
  func.func @transform_2(%arg0: i32) -> (i32, i32) {
    %c0_i32 = arith.constant 0 : i32
    %c0_i32_0 = arith.constant 0 : i32
    %c0_i32_1 = arith.constant 0 : i32
    return %c0_i32, %c0_i32_0 : i32, i32
  }
  func.func @transform_3(%arg0: i32) -> (i32, i32) {
    %c0_i32 = arith.constant 0 : i32
    %c0_i32_0 = arith.constant 0 : i32
    %c0_i32_1 = arith.constant 0 : i32
    return %c0_i32, %c0_i32_0 : i32, i32
  }
  func.func @transform_4(%arg0: i32) -> (i32, i32) {
    %c0_i32 = arith.constant 0 : i32
    %c0_i32_0 = arith.constant 0 : i32
    %c0_i32_1 = arith.constant 0 : i32
    return %c0_i32, %c0_i32_0 : i32, i32
  }
  func.func @transform_5(%arg0: i32) -> (i32, i32) {
    %c0_i32 = arith.constant 0 : i32
    %c0_i32_0 = arith.constant 0 : i32
    %c0_i32_1 = arith.constant 0 : i32
    return %c0_i32, %c0_i32_0 : i32, i32
  }
  func.func @transform_6(%arg0: i32) -> (i32, i32) {
    %c0_i32 = arith.constant 0 : i32
    %c0_i32_0 = arith.constant 0 : i32
    %c0_i32_1 = arith.constant 0 : i32
    return %c0_i32, %c0_i32_0 : i32, i32
  }
  func.func @transform_7(%arg0: i32) -> (i32, i32) {
    %c0_i32 = arith.constant 0 : i32
    %c0_i32_0 = arith.constant 0 : i32
    return %arg0, %c0_i32 : i32, i32
  }
}

</mosaic_0001>

<llo_original>
// kernel: mlp_net_v1_forward.1
$region0: #{mlp_net_v1_forward.1}
  #allocation0 [shape = 'u32[]', space=smem, size = 0x4, offset = 0x4, fixed_abs, tag = 'smem constant byte address 0x4 - core index']
  #allocation1 [shape = 'u32[144,128]{1,0:T(1,128)}', space=vmem, size = 0x12000, scoped, tag = 'internal scratch']
  %s0 = inlined_call_operand.vmem [shape: f32[8,3], index: 0, kind: input, shape index: {}]
  %s1 = inlined_call_operand.vmem [shape: f32[3,16], index: 1, kind: input, shape index: {}]
  %s2 = inlined_call_operand.vmem [shape: f32[1,16], index: 2, kind: input, shape index: {}]
  %s3 = inlined_call_operand.vmem [shape: bf16[16,32], index: 3, kind: input, shape index: {}]
  %s4 = inlined_call_operand.vmem [shape: f32[1,32], index: 4, kind: input, shape index: {}]
  %s5 = inlined_call_operand.vmem [shape: bf16[32,6], index: 5, kind: input, shape index: {}]
  %s6 = inlined_call_operand.vmem [shape: f32[1,6], index: 6, kind: input, shape index: {}]
  %s7 = inlined_call_operand.vmem [shape: f32[8,6], index: 7, kind: output, shape index: {}]
  %s8 = sld [smem:[#allocation0]]
  $region38: #{mlp_net_v1_forward.1} parent=0
    _
  %s10 = ssub.s32 1, %s8
  %s11 = scalar_select 0, %s10, %s8
  // Predicated region
  $region2: #{mlp_net_v1_forward.1} parent=0 // pred_check
    _
  $region3: #{mlp_net_v1_forward.1} parent=0 // pred_check_branch
    %13 = sbr.rel (0) target = $region5
  $region4: #{mlp_net_v1_forward.1} parent=0 // pred_region
    _
  $region5: #{mlp_net_v1_forward.1} parent=0 // pred_fallthru
    _
  // Predicated region
  $region6: #{mlp_net_v1_forward.1} parent=0 // pred_check
    _
  $region7: #{mlp_net_v1_forward.1} parent=0 // pred_check_branch
    %15 = sbr.rel (0) target = $region9
  $region8: #{mlp_net_v1_forward.1} parent=0 // pred_region
    _
  $region9: #{mlp_net_v1_forward.1} parent=0 // pred_fallthru
    _
  // Predicated region
  $region10: #{mlp_net_v1_forward.1} parent=0 // pred_check
    _
  $region11: #{mlp_net_v1_forward.1} parent=0 // pred_check_branch
    %17 = sbr.rel (0) target = $region13
  $region12: #{mlp_net_v1_forward.1} parent=0 // pred_region
    _
  $region13: #{mlp_net_v1_forward.1} parent=0 // pred_fallthru
    _
  // Predicated region
  $region14: #{mlp_net_v1_forward.1} parent=0 // pred_check
    _
  $region15: #{mlp_net_v1_forward.1} parent=0 // pred_check_branch
    %19 = sbr.rel (0) target = $region17
  $region16: #{mlp_net_v1_forward.1} parent=0 // pred_region
    _
  $region17: #{mlp_net_v1_forward.1} parent=0 // pred_fallthru
    _
  // Predicated region
  $region18: #{mlp_net_v1_forward.1} parent=0 // pred_check
    _
  $region19: #{mlp_net_v1_forward.1} parent=0 // pred_check_branch
    %21 = sbr.rel (0) target = $region21
  $region20: #{mlp_net_v1_forward.1} parent=0 // pred_region
    _
  $region21: #{mlp_net_v1_forward.1} parent=0 // pred_fallthru
    _
  // Predicated region
  $region22: #{mlp_net_v1_forward.1} parent=0 // pred_check
    _
  $region23: #{mlp_net_v1_forward.1} parent=0 // pred_check_branch
    %23 = sbr.rel (0) target = $region25
  $region24: #{mlp_net_v1_forward.1} parent=0 // pred_region
    _
  $region25: #{mlp_net_v1_forward.1} parent=0 // pred_fallthru
    _
  // Predicated region
  $region26: #{mlp_net_v1_forward.1} parent=0 // pred_check
    _
  $region27: #{mlp_net_v1_forward.1} parent=0 // pred_check_branch
    %25 = sbr.rel (0) target = $region29
  $region28: #{mlp_net_v1_forward.1} parent=0 // pred_region
    _
  $region29: #{mlp_net_v1_forward.1} parent=0 // pred_fallthru
    _
  %v27 = vld [vmem:[%s0] sm:$0xff]
  %v28 = vld [vmem:[%s1] sm:$0x7]
  %30 = vset.pattern.permute.xlu0 0
  %31 = vperm.xlu0 %30, %v27
  %v32 = vpop.permute.xlu0 %31
  %v34 = vlaneseq
  %v35 = vshrl.u32 %v34, 7
  %v36 = vsub.s32 0, %v35
  %v37 = vrot.slane %v28, %v36
  %v38 = vmul.f32 %v32, %v37
  %39 = vset.pattern.permute.xlu0 1
  %40 = vperm.xlu0 %39, %v27
  %v41 = vpop.permute.xlu0 %40
  %v43 = vlaneseq
  %v44 = vshrl.u32 %v43, 7
  %v45 = vsub.s32 1, %v44
  %v46 = vrot.slane %v28, %v45
  %v47 = vmul.f32 %v41, %v46
  %v48 = vadd.f32 %v38, %v47
  %49 = vset.pattern.permute.xlu0 2
  %50 = vperm.xlu0 %49, %v27
  %v51 = vpop.permute.xlu0 %50
  %v53 = vlaneseq
  %v54 = vshrl.u32 %v53, 7
  %v55 = vsub.s32 2, %v54
  %v56 = vrot.slane %v28, %v55
  %v57 = vmul.f32 %v51, %v56
  %v58 = vadd.f32 %v48, %v57
  %v59 = vld [vmem:[%s2] sm:$0x1]
  %v61 = vlaneseq
  %v62 = vshrl.u32 %v61, 7
  %v63 = vsub.s32 0, %v62
  %v64 = vrot.slane %v59, %v63
  %v66 = vadd.f32 %v58, %v64
  %v67 = vmax.f32 %v66, 0.0
  %v68 = vpack.c.bf16 %v67, %v67
  %v69 = vld [vmem:[%s3] sm:$0xf]
  %v70 = vld [vmem:[%s3 + $0x4] sm:$0xf]
  %v71 = vld [vmem:[%s4] sm:$0x1]
  %v73 = vlaneseq
  %v74 = vshrl.u32 %v73, 7
  %v75 = vsub.s32 0, %v74
  %v76 = vrot.slane %v71, %v75
  %v80 = vunpack.c.l.b16 %v69
  %v81 = vunpack.c.l.b16 %v70
  %v82 = vpack.c.b16 %v81, %v80
  %vm84 = vcmask 130048
  %v86 = vsel %vm84, %v68, 0
  %88 = vmatprep.subr.bf16.mxu0 0
  %89 = vmatpush1.bf16.msra.mxu0 0
  %90 = vmatprep.subr.bf16.mxu0 0
  %91 = vmatpush1.bf16.msra.mxu0 0
  %92 = vmatprep.subr.bf16.mxu0 0
  %93 = vmatpush1.bf16.msra.mxu0 0
  %94 = vmatprep.subr.bf16.mxu0 0
  %95 = vmatpush1.bf16.msra.mxu0 0
  %96 = vmatprep.subr.bf16.mxu0 0
  %97 = vmatpush1.bf16.msra.mxu0 0
  %98 = vmatprep.subr.bf16.mxu0 0
  %99 = vmatpush1.bf16.msra.mxu0 0
  %100 = vmatprep.subr.bf16.mxu0 0
  %101 = vmatpush1.bf16.msra.mxu0 0
  %102 = vmatprep.subr.bf16.mxu0 0
  %103 = vmatpush1.bf16.msra.mxu0 %v82
  %104 = vmatprep.subr.bf16.mxu0 0
  %105 = vmatpush2.bf16.msra.mxu0 0
  %106 = vmatprep.subr.bf16.mxu0 0
  %107 = vmatpush2.bf16.msra.mxu0 0
  %108 = vmatprep.subr.bf16.mxu0 0
  %109 = vmatpush2.bf16.msra.mxu0 0
  %110 = vmatprep.subr.bf16.mxu0 0
  %111 = vmatpush2.bf16.msra.mxu0 0
  %112 = vmatprep.subr.bf16.mxu0 0
  %113 = vmatpush2.bf16.msra.mxu0 0
  %114 = vmatprep.subr.bf16.mxu0 0
  %115 = vmatpush2.bf16.msra.mxu0 0
  %116 = vmatprep.subr.bf16.mxu0 0
  %117 = vmatpush2.bf16.msra.mxu0 0
  %118 = vmatprep.subr.bf16.mxu0 0
  %119 = vmatpush2.bf16.msra.mxu0 0
  %120 = vmatprep.mubr.bf16.mxu0 0
  %121 = vmatmul.mubr.bf16.gmra.mxu0 %v86
  %v122 = vpop.f32.mrf.mxu0
  %v123 = vadd.f32 %v76, %v122
  %v124 = vpop.f32.mrf.mxu0
  %v125 = vpop.f32.mrf.mxu0
  %v126 = vpop.f32.mrf.mxu0
  %127 = vdwg.mxu0
  %v128 = vmax.f32 %v123, 0.0
  %v129 = vpack.c.bf16 %v128, %v128
  %v130 = vld [vmem:[%s5] sm:$0xf]
  %v131 = vld [vmem:[%s5 + $0x4] sm:$0xf]
  %v132 = vld [vmem:[%s5 + $0x8] sm:$0xf]
  %v133 = vld [vmem:[%s5 + $0xc] sm:$0xf]
  %v134 = vld [vmem:[%s6] sm:$0x1]
  %v136 = vlaneseq
  %v137 = vshrl.u32 %v136, 7
  %v138 = vsub.s32 0, %v137
  %v139 = vrot.slane %v134, %v138
  %v145 = vunpack.c.l.b16 %v130
  %v146 = vunpack.c.l.b16 %v131
  %v147 = vunpack.c.l.b16 %v132
  %v148 = vunpack.c.l.b16 %v133
  %v149 = vpack.c.b16 %v146, %v145
  %v150 = vpack.c.b16 %v148, %v147
  %vm153 = vcmask 261120
  %v155 = vsel %vm153, %v129, 0
  %157 = vmatprep.subr.bf16.mxu0 0
  %158 = vmatpush1.bf16.msra.mxu0 0
  %159 = vmatprep.subr.bf16.mxu0 0
  %160 = vmatpush1.bf16.msra.mxu0 0
  %161 = vmatprep.subr.bf16.mxu0 0
  %162 = vmatpush1.bf16.msra.mxu0 0
  %163 = vmatprep.subr.bf16.mxu0 0
  %164 = vmatpush1.bf16.msra.mxu0 0
  %165 = vmatprep.subr.bf16.mxu0 0
  %166 = vmatpush1.bf16.msra.mxu0 0
  %167 = vmatprep.subr.bf16.mxu0 0
  %168 = vmatpush1.bf16.msra.mxu0 0
  %169 = vmatprep.subr.bf16.mxu0 0
  %170 = vmatpush1.bf16.msra.mxu0 %v150
  %171 = vmatprep.subr.bf16.mxu0 0
  %172 = vmatpush1.bf16.msra.mxu0 %v149
  %173 = vmatprep.subr.bf16.mxu0 0
  %174 = vmatpush2.bf16.msra.mxu0 0
  %175 = vmatprep.subr.bf16.mxu0 0
  %176 = vmatpush2.bf16.msra.mxu0 0
  %177 = vmatprep.subr.bf16.mxu0 0
  %178 = vmatpush2.bf16.msra.mxu0 0
  %179 = vmatprep.subr.bf16.mxu0 0
  %180 = vmatpush2.bf16.msra.mxu0 0
  %181 = vmatprep.subr.bf16.mxu0 0
  %182 = vmatpush2.bf16.msra.mxu0 0
  %183 = vmatprep.subr.bf16.mxu0 0
  %184 = vmatpush2.bf16.msra.mxu0 0
  %185 = vmatprep.subr.bf16.mxu0 0
  %186 = vmatpush2.bf16.msra.mxu0 0
  %187 = vmatprep.subr.bf16.mxu0 0
  %188 = vmatpush2.bf16.msra.mxu0 0
  %189 = vmatprep.mubr.bf16.mxu0 0
  %190 = vmatmul.mubr.bf16.gmra.mxu0 %v155
  %v191 = vpop.f32.mrf.mxu0
  %v192 = vadd.f32 %v139, %v191
  %v193 = vpop.f32.mrf.mxu0
  %v194 = vpop.f32.mrf.mxu0
  %v195 = vpop.f32.mrf.mxu0
  %196 = vdwg.mxu0
  %vm197 = vcmask 48128
  %v198 = vsel %vm197, %v192, -inf
  %199 = vmax.xlane.f32.xlu0 %v198
  %v200 = vpop.xlane.xlu0 %199
  %v201 = vsub.f32 %v192, %v200
  %v202 = vmul.f32 %v201, 1.442695
  %v203 = vpow.pop %v202
  %v204 = vsel %vm197, %v203, 0.0
  %205 = vadd.xlane.f32.xlu0 %v204
  %v206 = vpop.xlane.xlu0 %205
  %v207 = vrcp.pop %v206
  %v208 = vmul.f32 %v203, %v207
  %209 = vst.msk [vmem:[%s7] sm:$0xff] %vm197, %v208
  // Predicated region
  $region30: #{mlp_net_v1_forward.1} parent=0 // pred_check
    _
  $region31: #{mlp_net_v1_forward.1} parent=0 // pred_check_branch
    %211 = sbr.rel (0) target = $region33
  $region32: #{mlp_net_v1_forward.1} parent=0 // pred_region
    _
  $region33: #{mlp_net_v1_forward.1} parent=0 // pred_fallthru
    _
  // Predicated region
  $region34: #{mlp_net_v1_forward.1} parent=0 // pred_check
    _
  $region35: #{mlp_net_v1_forward.1} parent=0 // pred_check_branch
    %213 = sbr.rel (0) target = $region37
  $region36: #{mlp_net_v1_forward.1} parent=0 // pred_region
    _
  $region37: #{mlp_net_v1_forward.1} parent=0 // pred_fallthru
    _

</llo_original>
